<compile_context>
chip_gen: v6e
topology: v6e:2x2x1
jax: 0.10.0
libtpu: 0.0.40
codegen_flags: <defaults>
</compile_context>

<pallas_src>
import functools

import numpy as np
import jax
import jax.numpy as jnp
from jax import lax
from jax.experimental import pallas as pl
from jax.experimental.pallas import tpu as pltpu


def _choose_hw_tile(hw, c, itemsize, budget_bytes):
    """Spatial tile: full H*W if one batch-row fits the VMEM budget, otherwise
    the largest multiple of 128 that fits (the last, partial tile is masked
    inside the kernel)."""
    if hw * c * itemsize <= budget_bytes:
        return hw
    t = (budget_bytes // (c * itemsize)) // 128 * 128
    return max(128, int(t))


def _ca_kernel(hw, thw, nt, needs_mask,
               x_ref, w1t_ref, w2_ref, o_ref, sum_ref, max_ref):
    # x_ref  : (1, C, thw)  current spatial tile of one batch element (NCHW-native)
    # w1t_ref: (C, Cr)      first 1x1-conv weight, transposed (w1[j, c] -> w1t[c, j])
    # w2_ref : (C, Cr)      second 1x1-conv weight (natural layout)
    # o_ref  : (1, C, 1)    sigmoid(MLP(avg) + MLP(max)) for this batch element
    # sum_ref/max_ref: (C, 1) f32 accumulators (persist across the spatial axis)
    t = pl.program_id(1)

    @pl.when(t == 0)
    def _init():
        sum_ref[...] = jnp.zeros_like(sum_ref)
        max_ref[...] = jnp.full_like(max_ref, -jnp.inf)

    tile = x_ref[0].astype(jnp.float32)                        # (C, thw)

    if needs_mask:
        # Only the last block can extend past H*W; neutralize those lanes
        # (0 for the sum, -inf for the max).  Statically removed when H*W
        # tiles evenly.
        pos = lax.broadcasted_iota(jnp.int32, tile.shape, 1) + t * thw
        valid = pos < hw
        tile_s = jnp.where(valid, tile, 0.0)
        tile_m = jnp.where(valid, tile, -jnp.inf)
    else:
        tile_s = tile
        tile_m = tile

    sum_ref[...] += jnp.sum(tile_s, axis=1, keepdims=True)     # (C, 1)
    max_ref[...] = jnp.maximum(max_ref[...],
                               jnp.max(tile_m, axis=1, keepdims=True))

    # Only on the last reduction step: finish the pooling, run the shared MLP
    # and sigmoid entirely in VMEM, store the tiny output once.
    @pl.when(t == nt - 1)
    def _finish():
        w1t = w1t_ref[...]                                     # (C, Cr)
        w2 = w2_ref[...]                                       # (C, Cr)

        def shared_mlp(v_col):                                 # v_col: (C, 1)
            # Conv2d(C -> Cr, 1, bias=False): h[j] = sum_c w1[j, c] * v[c]
            h = jnp.sum(w1t * v_col, axis=0, keepdims=True)    # (1, Cr)
            h = jnp.maximum(h, 0.0)                            # ReLU
            # Conv2d(Cr -> C, 1, bias=False): y[k] = sum_j w2[k, j] * h[j]
            return jnp.sum(w2 * h, axis=1, keepdims=True)      # (C, 1)

        avg = sum_ref[...] * (1.0 / hw)                        # adaptive avg pool
        y = shared_mlp(avg) + shared_mlp(max_ref[...])
        o_ref[0] = jax.nn.sigmoid(y).astype(o_ref.dtype)


def channel_attention_forward(x, w1, w2, *, spatial_budget_bytes=8 << 20):
    """ChannelAttentionModule.forward.

    x : (B, C, H, W)           input feature map (NCHW, as in PyTorch)
    w1: (C//ratio, C, 1, 1)    first 1x1 conv weight (bias=False)
    w2: (C, C//ratio, 1, 1)    second 1x1 conv weight (bias=False)
    returns (B, C, 1, 1) attention map = sigmoid(MLP(avgpool) + MLP(maxpool)).
    """
    B, C, H, W = x.shape
    Cr = w1.shape[0]
    hw = H * W

    # Free reshapes only: x keeps its HBM layout; the tiny weights are squeezed
    # (and w1 transposed once) outside the kernel.
    xr = x.reshape(B, C, hw)
    w1t = w1.reshape(Cr, C).T.astype(jnp.float32)              # (C, Cr)
    w2m = w2.reshape(C, Cr).astype(jnp.float32)                # (C, Cr)

    thw = _choose_hw_tile(hw, C, xr.dtype.itemsize, spatial_budget_bytes)
    nt = -(-hw // thw)                                         # ceil-div
    needs_mask = (hw % thw) != 0

    kernel = functools.partial(_ca_kernel, hw, thw, nt, needs_mask)

    out = pl.pallas_call(
        kernel,
        out_shape=jax.ShapeDtypeStruct((B, C, 1), x.dtype),
        grid_spec=pltpu.PrefetchScalarGridSpec(
            num_scalar_prefetch=0,
            grid=(B, nt),                                      # spatial reduction innermost
            in_specs=[
                pl.BlockSpec((1, C, thw), lambda b, t: (b, 0, t)),
                pl.BlockSpec((C, Cr), lambda b, t: (0, 0)),
                pl.BlockSpec((C, Cr), lambda b, t: (0, 0)),
            ],
            out_specs=pl.BlockSpec((1, C, 1), lambda b, t: (b, 0, 0)),
            scratch_shapes=[pltpu.VMEM((C, 1), jnp.float32),   # running sum
                            pltpu.VMEM((C, 1), jnp.float32)],  # running max
        ),
        compiler_params=pltpu.CompilerParams(
            dimension_semantics=("parallel", "arbitrary"),
            vmem_limit_bytes=32 * 1024 * 1024),
    )(xr, w1t, w2m)

    return out.reshape(B, C, 1, 1)


def _reference(x, w1, w2):
    B, C, H, W = x.shape
    Cr = w1.shape[0]
    a = x.mean(axis=(2, 3))                                    # (B, C) avg pool
    m = x.max(axis=(2, 3))                                     # (B, C) max pool
    W1 = w1.reshape(Cr, C)
    W2 = w2.reshape(C, Cr)

    def mlp(v):
        return jnp.maximum(v @ W1.T, 0.0) @ W2.T

    return jax.nn.sigmoid(mlp(a) + mlp(m)).reshape(B, C, 1, 1)


if __name__ == "__main__":
    # Small shapes consistent with the module (ratio=16 requires C >= 16).
    B, C, ratio = 2, 64, 16
    Cr = C // ratio

    key = jax.random.PRNGKey(0)
    kx, k1, k2, kx2 = jax.random.split(key, 4)
    w1 = jax.random.normal(k1, (Cr, C, 1, 1), jnp.float32) / np.sqrt(C)
    w2 = jax.random.normal(k2, (C, Cr, 1, 1), jnp.float32) / np.sqrt(Cr)

    # Case 1: H*W fits in a single spatial tile.
    x = jax.random.normal(kx, (B, C, 16, 16), jnp.float32)
    y = jax.block_until_ready(jax.jit(channel_attention_forward)(x, w1, w2))
    y_ref = jax.block_until_ready(_reference(x, w1, w2))
    assert y.shape == (B, C, 1, 1), y.shape
    np.testing.assert_allclose(np.asarray(y), np.asarray(y_ref),
                               rtol=1e-5, atol=1e-5)

    # Case 2: force multi-tile streaming with a partial (masked) last tile
    # (tiny VMEM budget -> tile=128, H*W=529 not a multiple of 128).
    x2 = jax.random.normal(kx2, (B, C, 23, 23), jnp.float32)
    fwd_tiled = jax.jit(functools.partial(channel_attention_forward,
                                          spatial_budget_bytes=128 * C * 4))
    y2 = jax.block_until_ready(fwd_tiled(x2, w1, w2))
    y2_ref = jax.block_until_ready(_reference(x2, w1, w2))
    np.testing.assert_allclose(np.asarray(y2), np.asarray(y2_ref),
                               rtol=1e-5, atol=1e-5)

    print("KERNEL_OK")
</pallas_src>

<mosaic_0001>
module attributes {stable_mosaic.version = 11 : i64} {
  func.func @_ca_kernel(%arg0: i32, %arg1: i32, %arg2: memref<1x64x256xf32, #tpu.memory_space<vmem>>, %arg3: memref<64x4xf32, #tpu.memory_space<vmem>>, %arg4: memref<64x4xf32, #tpu.memory_space<vmem>>, %arg5: memref<1x64x1xf32, #tpu.memory_space<vmem>>, %arg6: memref<64x1xf32, #tpu.memory_space<vmem>>, %arg7: memref<64x1xf32, #tpu.memory_space<vmem>>) attributes {dimension_semantics = [#tpu.dimension_semantics<parallel>, #tpu.dimension_semantics<arbitrary>], iteration_bounds = array<i64: 2, 1>, scalar_prefetch = 0 : i64, scratch_operands = 2 : i64, tpu.core_type = #tpu.core_type<tc>, window_params = [{transform_indices = @transform_0, window_bounds = array<i64: 1, 64, 256>}, {pipeline_mode = #tpu.pipeline_mode<synchronous>, transform_indices = @transform_1, window_bounds = array<i64: 64, 4>}, {pipeline_mode = #tpu.pipeline_mode<synchronous>, transform_indices = @transform_2, window_bounds = array<i64: 64, 4>}, {transform_indices = @transform_3, window_bounds = array<i64: 1, 64, 1>}]} {
    %c0_i32 = arith.constant 0 : i32
    %0 = arith.cmpi eq, %arg1, %c0_i32 : i32
    %1 = arith.extui %0 : i1 to i32
    %c0_i32_0 = arith.constant 0 : i32
    %2 = arith.cmpi ne, %1, %c0_i32_0 : i32
    scf.if %2 {
      %cst_14 = arith.constant 0.000000e+00 : f32
      %18 = vector.broadcast %cst_14 : f32 to vector<64x1xf32>
      %c0_15 = arith.constant 0 : index
      %c0_16 = arith.constant 0 : index
      %19 = vector.load %arg6[%c0_15, %c0_16] : memref<64x1xf32, #tpu.memory_space<vmem>>, vector<64x1xf32>
      tpu.vector_store %arg6[%c0_15, %c0_16], %18 {strides = array<i32>} : memref<64x1xf32, #tpu.memory_space<vmem>>, vector<64x1xf32>,
      %cst_17 = arith.constant 0xFF800000 : f32
      %20 = vector.broadcast %cst_17 : f32 to vector<64x1xf32>
      %c0_18 = arith.constant 0 : index
      %c0_19 = arith.constant 0 : index
      %21 = vector.load %arg7[%c0_18, %c0_19] : memref<64x1xf32, #tpu.memory_space<vmem>>, vector<64x1xf32>
      tpu.vector_store %arg7[%c0_18, %c0_19], %20 {strides = array<i32>} : memref<64x1xf32, #tpu.memory_space<vmem>>, vector<64x1xf32>,
    } else {
    }
    %c0 = arith.constant 0 : index
    %c0_1 = arith.constant 0 : index
    %c0_2 = arith.constant 0 : index
    %3 = vector.load %arg2[%c0, %c0_1, %c0_2] : memref<1x64x256xf32, #tpu.memory_space<vmem>>, vector<1x64x256xf32>
    %4 = vector.shape_cast %3 : vector<1x64x256xf32> to vector<64x256xf32>
    %c0_3 = arith.constant 0 : index
    %c0_4 = arith.constant 0 : index
    %5 = vector.load %arg6[%c0_3, %c0_4] : memref<64x1xf32, #tpu.memory_space<vmem>>, vector<64x1xf32>
    %cst = arith.constant dense<0.000000e+00> : vector<64xf32>
    %6 = vector.multi_reduction <add>, %4, %cst [1] : vector<64x256xf32> to vector<64xf32>
    %7 = vector.shape_cast %6 : vector<64xf32> to vector<64x1xf32>
    %8 = arith.addf %5, %7 : vector<64x1xf32>
    %c0_5 = arith.constant 0 : index
    %c0_6 = arith.constant 0 : index
    %9 = vector.load %arg6[%c0_5, %c0_6] : memref<64x1xf32, #tpu.memory_space<vmem>>, vector<64x1xf32>
    tpu.vector_store %arg6[%c0_5, %c0_6], %8 {strides = array<i32>} : memref<64x1xf32, #tpu.memory_space<vmem>>, vector<64x1xf32>,
    %c0_7 = arith.constant 0 : index
    %c0_8 = arith.constant 0 : index
    %10 = vector.load %arg7[%c0_7, %c0_8] : memref<64x1xf32, #tpu.memory_space<vmem>>, vector<64x1xf32>
    %cst_9 = arith.constant dense<0xFF800000> : vector<64xf32>
    %11 = vector.multi_reduction <maximumf>, %4, %cst_9 [1] : vector<64x256xf32> to vector<64xf32>
    %12 = vector.shape_cast %11 : vector<64xf32> to vector<64x1xf32>
    %13 = arith.maximumf %10, %12 : vector<64x1xf32>
    %c0_10 = arith.constant 0 : index
    %c0_11 = arith.constant 0 : index
    %14 = vector.load %arg7[%c0_10, %c0_11] : memref<64x1xf32, #tpu.memory_space<vmem>>, vector<64x1xf32>
    tpu.vector_store %arg7[%c0_10, %c0_11], %13 {strides = array<i32>} : memref<64x1xf32, #tpu.memory_space<vmem>>, vector<64x1xf32>,
    %c0_i32_12 = arith.constant 0 : i32
    %15 = arith.cmpi eq, %arg1, %c0_i32_12 : i32
    %16 = arith.extui %15 : i1 to i32
    %c0_i32_13 = arith.constant 0 : i32
    %17 = arith.cmpi ne, %16, %c0_i32_13 : i32
    scf.if %17 {
      %c0_14 = arith.constant 0 : index
      %c0_15 = arith.constant 0 : index
      %18 = vector.load %arg3[%c0_14, %c0_15] : memref<64x4xf32, #tpu.memory_space<vmem>>, vector<64x4xf32>
      %c0_16 = arith.constant 0 : index
      %c0_17 = arith.constant 0 : index
      %19 = vector.load %arg4[%c0_16, %c0_17] : memref<64x4xf32, #tpu.memory_space<vmem>>, vector<64x4xf32>
      %c0_18 = arith.constant 0 : index
      %c0_19 = arith.constant 0 : index
      %20 = vector.load %arg6[%c0_18, %c0_19] : memref<64x1xf32, #tpu.memory_space<vmem>>, vector<64x1xf32>
      %cst_20 = arith.constant 3.906250e-03 : f32
      %21 = vector.broadcast %cst_20 : f32 to vector<64x1xf32>
      %22 = arith.mulf %20, %21 : vector<64x1xf32>
      %23 = vector.broadcast %22 : vector<64x1xf32> to vector<64x4xf32>
      %24 = arith.mulf %18, %23 : vector<64x4xf32>
      %cst_21 = arith.constant dense<0.000000e+00> : vector<4xf32>
      %25 = vector.multi_reduction <add>, %24, %cst_21 [0] : vector<64x4xf32> to vector<4xf32>
      %26 = vector.shape_cast %25 : vector<4xf32> to vector<1x4xf32>
      %cst_22 = arith.constant 0.000000e+00 : f32
      %27 = vector.broadcast %cst_22 : f32 to vector<1x4xf32>
      %28 = arith.maximumf %26, %27 : vector<1x4xf32>
      %29 = vector.broadcast %28 : vector<1x4xf32> to vector<64x4xf32>
      %30 = arith.mulf %19, %29 : vector<64x4xf32>
      %cst_23 = arith.constant dense<0.000000e+00> : vector<64xf32>
      %31 = vector.multi_reduction <add>, %30, %cst_23 [1] : vector<64x4xf32> to vector<64xf32>
      %32 = vector.shape_cast %31 : vector<64xf32> to vector<64x1xf32>
      %c0_24 = arith.constant 0 : index
      %c0_25 = arith.constant 0 : index
      %33 = vector.load %arg7[%c0_24, %c0_25] : memref<64x1xf32, #tpu.memory_space<vmem>>, vector<64x1xf32>
      %34 = vector.broadcast %33 : vector<64x1xf32> to vector<64x4xf32>
      %35 = arith.mulf %18, %34 : vector<64x4xf32>
      %cst_26 = arith.constant dense<0.000000e+00> : vector<4xf32>
      %36 = vector.multi_reduction <add>, %35, %cst_26 [0] : vector<64x4xf32> to vector<4xf32>
      %37 = vector.shape_cast %36 : vector<4xf32> to vector<1x4xf32>
      %cst_27 = arith.constant 0.000000e+00 : f32
      %38 = vector.broadcast %cst_27 : f32 to vector<1x4xf32>
      %39 = arith.maximumf %37, %38 : vector<1x4xf32>
      %40 = vector.broadcast %39 : vector<1x4xf32> to vector<64x4xf32>
      %41 = arith.mulf %19, %40 : vector<64x4xf32>
      %cst_28 = arith.constant dense<0.000000e+00> : vector<64xf32>
      %42 = vector.multi_reduction <add>, %41, %cst_28 [1] : vector<64x4xf32> to vector<64xf32>
      %43 = vector.shape_cast %42 : vector<64xf32> to vector<64x1xf32>
      %44 = arith.addf %32, %43 : vector<64x1xf32>
      %45 = arith.negf %44 : vector<64x1xf32>
      %46 = math.exp %45 : vector<64x1xf32>
      %cst_29 = arith.constant 1.000000e+00 : f32
      %47 = vector.broadcast %cst_29 : f32 to vector<64x1xf32>
      %48 = arith.addf %47, %46 : vector<64x1xf32>
      %49 = arith.divf %47, %48 : vector<64x1xf32>
      %c0_30 = arith.constant 0 : index
      %c0_31 = arith.constant 0 : index
      %c0_32 = arith.constant 0 : index
      %50 = vector.load %arg5[%c0_30, %c0_31, %c0_32] : memref<1x64x1xf32, #tpu.memory_space<vmem>>, vector<1x64x1xf32>
      %51 = vector.shape_cast %50 : vector<1x64x1xf32> to vector<64x1xf32>
      %52 = vector.shape_cast %49 : vector<64x1xf32> to vector<1x64x1xf32>
      tpu.vector_store %arg5[%c0_30, %c0_31, %c0_32], %52 {strides = array<i32>} : memref<1x64x1xf32, #tpu.memory_space<vmem>>, vector<1x64x1xf32>,
    } else {
    }
    return
  }
  func.func @transform_0(%arg0: i32, %arg1: i32) -> (i32, i32, i32) {
    %c0_i32 = arith.constant 0 : i32
    %c0_i32_0 = arith.constant 0 : i32
    return %arg0, %c0_i32, %arg1 : i32, i32, i32
  }
  func.func @transform_1(%arg0: i32, %arg1: i32) -> (i32, i32) {
    %c0_i32 = arith.constant 0 : i32
    %c0_i32_0 = arith.constant 0 : i32
    %c0_i32_1 = arith.constant 0 : i32
    return %c0_i32, %c0_i32_0 : i32, i32
  }
  func.func @transform_2(%arg0: i32, %arg1: i32) -> (i32, i32) {
    %c0_i32 = arith.constant 0 : i32
    %c0_i32_0 = arith.constant 0 : i32
    %c0_i32_1 = arith.constant 0 : i32
    return %c0_i32, %c0_i32_0 : i32, i32
  }
  func.func @transform_3(%arg0: i32, %arg1: i32) -> (i32, i32, i32) {
    %c0_i32 = arith.constant 0 : i32
    %c0_i32_0 = arith.constant 0 : i32
    %c0_i32_1 = arith.constant 0 : i32
    return %arg0, %c0_i32, %c0_i32_0 : i32, i32, i32
  }
}

</mosaic_0001>

<llo_original>
// kernel: channel_attention_forward.1
$region0: #{channel_attention_forward.1}
  #allocation0 [shape = 'u32[]', space=smem, size = 0x4, offset = 0x4, fixed_abs, tag = 'smem constant byte address 0x4 - core index']
  #allocation1 [shape = 'u32[144,128]{1,0:T(1,128)}', space=vmem, size = 0x12000, scoped, tag = 'internal scratch']
  #allocation2 [shape = 'f32[64,1]{1,0:T(8,128)}', space=vmem, size = 0x8000, scoped, tag = 'scratch operand']
  #allocation3 [shape = 'f32[64,1]{1,0:T(8,128)}', space=vmem, size = 0x8000, scoped, tag = 'scratch operand']
  %s0 = inlined_call_operand.vmem [shape: f32[2,64,256], index: 0, kind: input, shape index: {}]
  %s1 = inlined_call_operand.vmem [shape: f32[64,4], index: 1, kind: input, shape index: {}]
  %s2 = inlined_call_operand.vmem [shape: f32[64,4], index: 2, kind: input, shape index: {}]
  %s3 = inlined_call_operand.vmem [shape: f32[2,64,1], index: 3, kind: output, shape index: {}]
  %s4 = sld [smem:[#allocation0]]
  $region53: #{channel_attention_forward.1} parent=0
    _
  %s6 = ssub.s32 1, %s4
  %s7 = scalar_select 0, %s6, %s4
  loop: start=0, step=1, limit=4
  $region2: #{channel_attention_forward.1} parent=0 // loop_pre_header
    _
  $region3: #{channel_attention_forward.1} parent=0 // loop_header
    %s9 = sphi 0, %s13
    %p10 = scmp.ge.s32.totalorder %s9, 4
    %s16 = sphi 0, %s28
    %s17 = sphi 0, %s24
    %s18 = sphi 0, %s16
    %s19 = sphi 0, %s17
    %s20 = sphi 0, %s18
    %s21 = sphi 0, %s19
    %s33 = sphi 0, %s35
    %s36 = sphi 0, %s33
    %s37 = sphi 0, %s36
    %s53 = sphi 0, %s37
    %s57 = sphi 0, %s57
    %s59 = sphi 0, %s57
    %s60 = sphi 0, %s59
    %s74 = sphi 0, %s60
    %s78 = sphi 0, %s78
    %s80 = sphi 0, %s78
    %s81 = sphi 0, %s80
    %s95 = sphi 0, %s81
    %s101 = sphi 0, %s103
    %s104 = sphi 0, %s101
    %s105 = sphi 0, %s104
    %s121 = sphi 0, %s105
  $region4: #{channel_attention_forward.1} parent=0 // loop_header_branch
    %12 = sbr.rel (%p10) target = $region8
  $region5: #{channel_attention_forward.1} parent=0 // loop_body
    %s14 = ssub.s32 %s9, 1
    %s15 = ssub.s32 %s9, 2
    %s22 = sadd.s32 1, %s17
    %p23 = scmp.ge.s32.totalorder %s22, 1
    %s24 = scalar_select %p23, 0, %s22
    %s25 = sadd.s32 1, %s16
    %s26 = scalar_select %p23, %s25, %s16
    %p27 = scmp.ge.s32.totalorder %s26, 2
    %s28 = scalar_select %p27, 0, %s26
    %s29 = ssub.s32 %s16, %s28
    %s30 = ssub.s32 %s17, %s24
    %s31 = sor.u32 %s29, %s30
    %p32 = scmp.eq.s32.totalorder %s31, 0
    %s34 = sadd.s32 %s33, 1
    %s35 = scalar_select %p32, %s33, %s34
    %p38 = pneg %p32
    %p39 = scmp.eq.s32.totalorder %s9, 1
    %p40 = por %p38, %p39
    %p41 = scmp.ne.s32.totalorder %s33, %s36
    %p42 = scmp.eq.s32.totalorder %s9, 0
    %p43 = por %p41, %p42
    %p44 = scmp.ne.s32.totalorder %s33, %s36
    %p45 = scmp.eq.s32.totalorder %s14, 1
    %p46 = por %p44, %p45
    %p47 = scmp.ne.s32.totalorder %s36, %s37
    %p48 = scmp.eq.s32.totalorder %s14, 0
    %p49 = por %p47, %p48
    %p50 = scmp.ne.s32.totalorder %s36, %s37
    %p51 = scmp.eq.s32.totalorder %s15, 1
    %p52 = por %p50, %p51
    %p54 = scmp.ne.s32.totalorder %s37, %s53
    %p55 = scmp.eq.s32.totalorder %s15, 0
    %p56 = por %p54, %p55
    %s58 = sadd.s32 %s57, 1
    %p61 = scmp.eq.s32.totalorder %s9, 1
    %p62 = scmp.ne.s32.totalorder %s57, %s59
    %p63 = scmp.eq.s32.totalorder %s9, 0
    %p64 = por %p62, %p63
    %p65 = scmp.ne.s32.totalorder %s57, %s59
    %p66 = scmp.eq.s32.totalorder %s14, 1
    %p67 = por %p65, %p66
    %p68 = scmp.ne.s32.totalorder %s59, %s60
    %p69 = scmp.eq.s32.totalorder %s14, 0
    %p70 = por %p68, %p69
    %p71 = scmp.ne.s32.totalorder %s59, %s60
    %p72 = scmp.eq.s32.totalorder %s15, 1
    %p73 = por %p71, %p72
    %p75 = scmp.ne.s32.totalorder %s60, %s74
    %p76 = scmp.eq.s32.totalorder %s15, 0
    %p77 = por %p75, %p76
    %s79 = sadd.s32 %s78, 1
    %p82 = scmp.eq.s32.totalorder %s9, 1
    %p83 = scmp.ne.s32.totalorder %s78, %s80
    %p84 = scmp.eq.s32.totalorder %s9, 0
    %p85 = por %p83, %p84
    %p86 = scmp.ne.s32.totalorder %s78, %s80
    %p87 = scmp.eq.s32.totalorder %s14, 1
    %p88 = por %p86, %p87
    %p89 = scmp.ne.s32.totalorder %s80, %s81
    %p90 = scmp.eq.s32.totalorder %s14, 0
    %p91 = por %p89, %p90
    %p92 = scmp.ne.s32.totalorder %s80, %s81
    %p93 = scmp.eq.s32.totalorder %s15, 1
    %p94 = por %p92, %p93
    %p96 = scmp.ne.s32.totalorder %s81, %s95
    %p97 = scmp.eq.s32.totalorder %s15, 0
    %p98 = por %p96, %p97
    %s99 = ssub.s32 %s16, %s28
    %p100 = scmp.eq.s32.totalorder %s99, 0
    %s102 = sadd.s32 %s101, 1
    %s103 = scalar_select %p100, %s101, %s102
    %p106 = pneg %p100
    %p107 = scmp.eq.s32.totalorder %s9, 1
    %p108 = por %p106, %p107
    %p109 = scmp.ne.s32.totalorder %s101, %s104
    %p110 = scmp.eq.s32.totalorder %s9, 0
    %p111 = por %p109, %p110
    %p112 = scmp.ne.s32.totalorder %s101, %s104
    %p113 = scmp.eq.s32.totalorder %s14, 1
    %p114 = por %p112, %p113
    %p115 = scmp.ne.s32.totalorder %s104, %s105
    %p116 = scmp.eq.s32.totalorder %s14, 0
    %p117 = por %p115, %p116
    %p118 = scmp.ne.s32.totalorder %s104, %s105
    %p119 = scmp.eq.s32.totalorder %s15, 1
    %p120 = por %p118, %p119
    %p122 = scmp.ne.s32.totalorder %s105, %s121
    %p123 = scmp.eq.s32.totalorder %s15, 0
    %p124 = por %p122, %p123
    %p125 = scmp.le.s32.totalorder 1, %s9
    %p126 = scmp.lt.s32.totalorder %s9, 3
    %p127 = pnand %p125, %p126
    %p128 = pneg %p127
    // Predicated region
    $region9: #{channel_attention_forward.1} parent=5 // pred_check
      _
    $region10: #{channel_attention_forward.1} parent=5 // pred_check_branch
      %130 = sbr.rel (%p127) target = $region12
    $region11: #{channel_attention_forward.1} parent=5 // pred_region
      %s131 = ssub.s32 %s9, 1
      // Predicated region
      $region13: #{channel_attention_forward.1} parent=11 // pred_check
        %p132 = pneg %p70
      $region14: #{channel_attention_forward.1} parent=11 // pred_check_branch
        %134 = sbr.rel (%p132) target = $region16
      $region15: #{channel_attention_forward.1} parent=11 // pred_region
        _
      $region16: #{channel_attention_forward.1} parent=11 // pred_fallthru
        _
      // Predicated region
      $region17: #{channel_attention_forward.1} parent=11 // pred_check
        %p135 = pneg %p91
      $region18: #{channel_attention_forward.1} parent=11 // pred_check_branch
        %137 = sbr.rel (%p135) target = $region20
      $region19: #{channel_attention_forward.1} parent=11 // pred_region
        _
      $region20: #{channel_attention_forward.1} parent=11 // pred_fallthru
        _
    $region12: #{channel_attention_forward.1} parent=5 // pred_fallthru
      _
    %p138 = scmp.lt.s32.totalorder %s9, 2
    // Predicated region
    $region21: #{channel_attention_forward.1} parent=5 // pred_check
      %p139 = pneg %p138
    $region22: #{channel_attention_forward.1} parent=5 // pred_check_branch
      %141 = sbr.rel (%p139) target = $region24
    $region23: #{channel_attention_forward.1} parent=5 // pred_region
      // Predicated region
      $region25: #{channel_attention_forward.1} parent=23 // pred_check
        %p142 = pneg %p43
      $region26: #{channel_attention_forward.1} parent=23 // pred_check_branch
        %144 = sbr.rel (%p142) target = $region28
      $region27: #{channel_attention_forward.1} parent=23 // pred_region
        %s145 = smul.u32 2, %s17
        %p146 = scmp.lt.s32.totalorder %s16, 1
        %s147 = scalar_select %p146, %s16, 1
        %p148 = scmp.lt.s32.totalorder %s145, 1
        %s149 = scalar_select %p148, %s145, 1
        %s150 = smul.addr %s147, 16
        %s151 = sadd.s32 %s149, %s150
        %s152 = smul.addr %s151, 8
        %s153 = scalar_lea.vmem %s0, %s152
        %s154 = smul.u32 2, %s17
      $region28: #{channel_attention_forward.1} parent=23 // pred_fallthru
        _
    $region24: #{channel_attention_forward.1} parent=5 // pred_fallthru
      _
    %p155 = scmp.le.s32.totalorder 1, %s9
    %p156 = scmp.lt.s32.totalorder %s9, 3
    %p157 = pnand %p155, %p156
    %p158 = pneg %p157
    // Predicated region
    $region29: #{channel_attention_forward.1} parent=5 // pred_check
      _
    $region30: #{channel_attention_forward.1} parent=5 // pred_check_branch
      %160 = sbr.rel (%p157) target = $region32
    $region31: #{channel_attention_forward.1} parent=5 // pred_region
      %s161 = ssub.s32 %s9, 1
      %s162 = smul.u32 2, %s19
      %p163 = scmp.lt.s32.totalorder %s18, 1
      %s164 = scalar_select %p163, %s18, 1
      %p165 = scmp.lt.s32.totalorder %s162, 1
      %s166 = scalar_select %p165, %s162, 1
      %s167 = smul.addr %s164, 16
      %s168 = sadd.s32 %s166, %s167
      %s169 = smul.addr %s168, 8
      %s170 = scalar_lea.vmem %s0, %s169
      %p171 = pneg %p49
      %p172 = pneg %p46
      %p173 = pneg %p70
      %p174 = pneg %p67
      %p175 = pneg %p91
      %p176 = pneg %p88
      %p177 = pneg %p117
      %p178 = pneg %p114
      %p179 = scmp.lt.s32.totalorder %s18, 1
      %s180 = scalar_select %p179, %s18, 1
      %s181 = smul.addr %s180, 8
      %s182 = smul.addr %s181, 8
      %s183 = scalar_lea.vmem %s3, %s182
      %s184 = smul.u32 2, %s19
      %p185 = scmp.lt.s32.totalorder %s18, 1
      %s186 = scalar_select %p185, %s18, 1
      %p187 = scmp.lt.s32.totalorder %s184, 1
      %s188 = scalar_select %p187, %s184, 1
      %s189 = smul.addr %s186, 16
      %s190 = sadd.s32 %s188, %s189
      %s191 = smul.addr %s190, 8
      %s192 = scalar_lea.vmem %s0, %s191
      %s193 = smul.u32 2, %s19
      %p194 = scmp.lt.s32.totalorder %s18, 1
      %s195 = scalar_select %p194, %s18, 1
      %s196 = smul.addr %s195, 8
      %s197 = smul.addr %s196, 8
      %s198 = scalar_lea.vmem %s3, %s197
      %p199 = scmp.eq.s32.totalorder %s19, 0
      // Predicated region
      $region33: #{channel_attention_forward.1} parent=31 // pred_check
        %p200 = pneg %p199
      $region34: #{channel_attention_forward.1} parent=31 // pred_check_branch
        %202 = sbr.rel (%p200) target = $region36
      $region35: #{channel_attention_forward.1} parent=31 // pred_region
        %vm203 = vcmask 7168
        %204 = vst.msk [vmem:[#allocation2] sm:$0xff] %vm203, 0.0
        %205 = vst.msk [vmem:[#allocation2 + $0x8] sm:$0xff] %vm203, 0.0
        %206 = vst.msk [vmem:[#allocation2 + $0x10] sm:$0xff] %vm203, 0.0
        %207 = vst.msk [vmem:[#allocation2 + $0x18] sm:$0xff] %vm203, 0.0
        %208 = vst.msk [vmem:[#allocation2 + $0x20] sm:$0xff] %vm203, 0.0
        %209 = vst.msk [vmem:[#allocation2 + $0x28] sm:$0xff] %vm203, 0.0
        %210 = vst.msk [vmem:[#allocation2 + $0x30] sm:$0xff] %vm203, 0.0
        %211 = vst.msk [vmem:[#allocation2 + $0x38] sm:$0xff] %vm203, 0.0
        %212 = vst.msk [vmem:[#allocation3] sm:$0xff] %vm203, -inf
        %213 = vst.msk [vmem:[#allocation3 + $0x8] sm:$0xff] %vm203, -inf
        %214 = vst.msk [vmem:[#allocation3 + $0x10] sm:$0xff] %vm203, -inf
        %215 = vst.msk [vmem:[#allocation3 + $0x18] sm:$0xff] %vm203, -inf
        %216 = vst.msk [vmem:[#allocation3 + $0x20] sm:$0xff] %vm203, -inf
        %217 = vst.msk [vmem:[#allocation3 + $0x28] sm:$0xff] %vm203, -inf
        %218 = vst.msk [vmem:[#allocation3 + $0x30] sm:$0xff] %vm203, -inf
        %219 = vst.msk [vmem:[#allocation3 + $0x38] sm:$0xff] %vm203, -inf
      $region36: #{channel_attention_forward.1} parent=31 // pred_fallthru
        _
      %v220 = vld [vmem:[%s192] sm:$0xff]
      %v221 = vld [vmem:[%s192 + $0x8] sm:$0xff]
      %v222 = vld [vmem:[%s192 + $0x10] sm:$0xff]
      %v223 = vld [vmem:[%s192 + $0x18] sm:$0xff]
      %v224 = vld [vmem:[%s192 + $0x20] sm:$0xff]
      %v225 = vld [vmem:[%s192 + $0x28] sm:$0xff]
      %v226 = vld [vmem:[%s192 + $0x30] sm:$0xff]
      %v227 = vld [vmem:[%s192 + $0x38] sm:$0xff]
      %v228 = vld [vmem:[%s192 + $0x40] sm:$0xff]
      %v229 = vld [vmem:[%s192 + $0x48] sm:$0xff]
      %v230 = vld [vmem:[%s192 + $0x50] sm:$0xff]
      %v231 = vld [vmem:[%s192 + $0x58] sm:$0xff]
      %v232 = vld [vmem:[%s192 + $0x60] sm:$0xff]
      %v233 = vld [vmem:[%s192 + $0x68] sm:$0xff]
      %v234 = vld [vmem:[%s192 + $0x70] sm:$0xff]
      %v235 = vld [vmem:[%s192 + $0x78] sm:$0xff]
      %v236 = vld [vmem:[#allocation2] sm:$0xff]
      %v237 = vld [vmem:[#allocation2 + $0x8] sm:$0xff]
      %v238 = vld [vmem:[#allocation2 + $0x10] sm:$0xff]
      %v239 = vld [vmem:[#allocation2 + $0x18] sm:$0xff]
      %v240 = vld [vmem:[#allocation2 + $0x20] sm:$0xff]
      %v241 = vld [vmem:[#allocation2 + $0x28] sm:$0xff]
      %v242 = vld [vmem:[#allocation2 + $0x30] sm:$0xff]
      %v243 = vld [vmem:[#allocation2 + $0x38] sm:$0xff]
      %v244 = vadd.f32 %v220, %v221
      %245 = vadd.xlane.f32.xlu0 %v244
      %v246 = vpop.xlane.xlu0 %245
      %v247 = vadd.f32 %v222, %v223
      %248 = vadd.xlane.f32.xlu0 %v247
      %v249 = vpop.xlane.xlu0 %248
      %v250 = vadd.f32 %v224, %v225
      %251 = vadd.xlane.f32.xlu0 %v250
      %v252 = vpop.xlane.xlu0 %251
      %v253 = vadd.f32 %v226, %v227
      %254 = vadd.xlane.f32.xlu0 %v253
      %v255 = vpop.xlane.xlu0 %254
      %v256 = vadd.f32 %v228, %v229
      %257 = vadd.xlane.f32.xlu0 %v256
      %v258 = vpop.xlane.xlu0 %257
      %v259 = vadd.f32 %v230, %v231
      %260 = vadd.xlane.f32.xlu0 %v259
      %v261 = vpop.xlane.xlu0 %260
      %v262 = vadd.f32 %v232, %v233
      %263 = vadd.xlane.f32.xlu0 %v262
      %v264 = vpop.xlane.xlu0 %263
      %v265 = vadd.f32 %v234, %v235
      %266 = vadd.xlane.f32.xlu0 %v265
      %v267 = vpop.xlane.xlu0 %266
      %v268 = vadd.f32 %v236, %v246
      %v269 = vadd.f32 %v237, %v249
      %v270 = vadd.f32 %v238, %v252
      %v271 = vadd.f32 %v239, %v255
      %v272 = vadd.f32 %v240, %v258
      %v273 = vadd.f32 %v241, %v261
      %v274 = vadd.f32 %v242, %v264
      %v275 = vadd.f32 %v243, %v267
      %vm276 = vcmask 7168
      %277 = vst.msk [vmem:[#allocation2] sm:$0xff] %vm276, %v268
      %278 = vst.msk [vmem:[#allocation2 + $0x8] sm:$0xff] %vm276, %v269
      %279 = vst.msk [vmem:[#allocation2 + $0x10] sm:$0xff] %vm276, %v270
      %280 = vst.msk [vmem:[#allocation2 + $0x18] sm:$0xff] %vm276, %v271
      %281 = vst.msk [vmem:[#allocation2 + $0x20] sm:$0xff] %vm276, %v272
      %282 = vst.msk [vmem:[#allocation2 + $0x28] sm:$0xff] %vm276, %v273
      %283 = vst.msk [vmem:[#allocation2 + $0x30] sm:$0xff] %vm276, %v274
      %284 = vst.msk [vmem:[#allocation2 + $0x38] sm:$0xff] %vm276, %v275
      %v285 = vld [vmem:[#allocation3] sm:$0xff]
      %v286 = vld [vmem:[#allocation3 + $0x8] sm:$0xff]
      %v287 = vld [vmem:[#allocation3 + $0x10] sm:$0xff]
      %v288 = vld [vmem:[#allocation3 + $0x18] sm:$0xff]
      %v289 = vld [vmem:[#allocation3 + $0x20] sm:$0xff]
      %v290 = vld [vmem:[#allocation3 + $0x28] sm:$0xff]
      %v291 = vld [vmem:[#allocation3 + $0x30] sm:$0xff]
      %v292 = vld [vmem:[#allocation3 + $0x38] sm:$0xff]
      %v293 = vmax.f32 %v220, %v221
      %294 = vmax.xlane.f32.xlu0 %v293
      %v295 = vpop.xlane.xlu0 %294
      %v296 = vmax.f32 %v222, %v223
      %297 = vmax.xlane.f32.xlu0 %v296
      %v298 = vpop.xlane.xlu0 %297
      %v299 = vmax.f32 %v224, %v225
      %300 = vmax.xlane.f32.xlu0 %v299
      %v301 = vpop.xlane.xlu0 %300
      %v302 = vmax.f32 %v226, %v227
      %303 = vmax.xlane.f32.xlu0 %v302
      %v304 = vpop.xlane.xlu0 %303
      %v305 = vmax.f32 %v228, %v229
      %306 = vmax.xlane.f32.xlu0 %v305
      %v307 = vpop.xlane.xlu0 %306
      %v308 = vmax.f32 %v230, %v231
      %309 = vmax.xlane.f32.xlu0 %v308
      %v310 = vpop.xlane.xlu0 %309
      %v311 = vmax.f32 %v232, %v233
      %312 = vmax.xlane.f32.xlu0 %v311
      %v313 = vpop.xlane.xlu0 %312
      %v314 = vmax.f32 %v234, %v235
      %315 = vmax.xlane.f32.xlu0 %v314
      %v316 = vpop.xlane.xlu0 %315
      %v317 = vmax.f32 %v285, %v295
      %v318 = vmax.f32 %v286, %v298
      %v319 = vmax.f32 %v287, %v301
      %v320 = vmax.f32 %v288, %v304
      %v321 = vmax.f32 %v289, %v307
      %v322 = vmax.f32 %v290, %v310
      %v323 = vmax.f32 %v291, %v313
      %v324 = vmax.f32 %v292, %v316
      %325 = vst.msk [vmem:[#allocation3] sm:$0xff] %vm276, %v317
      %326 = vst.msk [vmem:[#allocation3 + $0x8] sm:$0xff] %vm276, %v318
      %327 = vst.msk [vmem:[#allocation3 + $0x10] sm:$0xff] %vm276, %v319
      %328 = vst.msk [vmem:[#allocation3 + $0x18] sm:$0xff] %vm276, %v320
      %329 = vst.msk [vmem:[#allocation3 + $0x20] sm:$0xff] %vm276, %v321
      %330 = vst.msk [vmem:[#allocation3 + $0x28] sm:$0xff] %vm276, %v322
      %331 = vst.msk [vmem:[#allocation3 + $0x30] sm:$0xff] %vm276, %v323
      %332 = vst.msk [vmem:[#allocation3 + $0x38] sm:$0xff] %vm276, %v324
      // Predicated region
      $region37: #{channel_attention_forward.1} parent=31 // pred_check
        %p333 = pneg %p199
      $region38: #{channel_attention_forward.1} parent=31 // pred_check_branch
        %335 = sbr.rel (%p333) target = $region40
      $region39: #{channel_attention_forward.1} parent=31 // pred_region
        %v336 = vld [vmem:[%s1] sm:$0xff]
        %v337 = vld [vmem:[%s1 + $0x8] sm:$0xff]
        %v338 = vld [vmem:[%s1 + $0x10] sm:$0xff]
        %v339 = vld [vmem:[%s1 + $0x18] sm:$0xff]
        %v340 = vld [vmem:[%s1 + $0x20] sm:$0xff]
        %v341 = vld [vmem:[%s1 + $0x28] sm:$0xff]
        %v342 = vld [vmem:[%s1 + $0x30] sm:$0xff]
        %v343 = vld [vmem:[%s1 + $0x38] sm:$0xff]
        %v344 = vld [vmem:[%s2] sm:$0xff]
        %v345 = vld [vmem:[%s2 + $0x8] sm:$0xff]
        %v346 = vld [vmem:[%s2 + $0x10] sm:$0xff]
        %v347 = vld [vmem:[%s2 + $0x18] sm:$0xff]
        %v348 = vld [vmem:[%s2 + $0x20] sm:$0xff]
        %v349 = vld [vmem:[%s2 + $0x28] sm:$0xff]
        %v350 = vld [vmem:[%s2 + $0x30] sm:$0xff]
        %v351 = vld [vmem:[%s2 + $0x38] sm:$0xff]
        %v352 = vld [vmem:[#allocation2] sm:$0xff]
        %v353 = vld [vmem:[#allocation2 + $0x8] sm:$0xff]
        %v354 = vld [vmem:[#allocation2 + $0x10] sm:$0xff]
        %v355 = vld [vmem:[#allocation2 + $0x18] sm:$0xff]
        %v356 = vld [vmem:[#allocation2 + $0x20] sm:$0xff]
        %v357 = vld [vmem:[#allocation2 + $0x28] sm:$0xff]
        %v358 = vld [vmem:[#allocation2 + $0x30] sm:$0xff]
        %v359 = vld [vmem:[#allocation2 + $0x38] sm:$0xff]
        %v360 = vmul.f32 %v352, 0.00390625
        %v361 = vmul.f32 %v353, 0.00390625
        %v362 = vmul.f32 %v354, 0.00390625
        %v363 = vmul.f32 %v355, 0.00390625
        %v364 = vmul.f32 %v356, 0.00390625
        %v365 = vmul.f32 %v357, 0.00390625
        %v366 = vmul.f32 %v358, 0.00390625
        %v367 = vmul.f32 %v359, 0.00390625
        %369 = vset.pattern.permute.xlu0 0
        %370 = vperm.xlu0 %369, %v360
        %v371 = vpop.permute.xlu0 %370
        %374 = vset.pattern.permute.xlu0 0
        %375 = vperm.xlu0 %374, %v361
        %v376 = vpop.permute.xlu0 %375
        %379 = vset.pattern.permute.xlu0 0
        %380 = vperm.xlu0 %379, %v362
        %v381 = vpop.permute.xlu0 %380
        %384 = vset.pattern.permute.xlu0 0
        %385 = vperm.xlu0 %384, %v363
        %v386 = vpop.permute.xlu0 %385
        %389 = vset.pattern.permute.xlu0 0
        %390 = vperm.xlu0 %389, %v364
        %v391 = vpop.permute.xlu0 %390
        %394 = vset.pattern.permute.xlu0 0
        %395 = vperm.xlu0 %394, %v365
        %v396 = vpop.permute.xlu0 %395
        %399 = vset.pattern.permute.xlu0 0
        %400 = vperm.xlu0 %399, %v366
        %v401 = vpop.permute.xlu0 %400
        %404 = vset.pattern.permute.xlu0 0
        %405 = vperm.xlu0 %404, %v367
        %v406 = vpop.permute.xlu0 %405
        %v408 = vmul.f32 %v336, %v371
        %v409 = vmul.f32 %v337, %v376
        %v410 = vmul.f32 %v338, %v381
        %v411 = vmul.f32 %v339, %v386
        %v412 = vmul.f32 %v340, %v391
        %v413 = vmul.f32 %v341, %v396
        %v414 = vmul.f32 %v342, %v401
        %v415 = vmul.f32 %v343, %v406
        %vm416 = vcmask 31744
        %v417 = vsel %vm416, %v408, 0.0
        %v418 = vsel %vm416, %v409, 0.0
        %v419 = vadd.f32 %v417, %v418
        %v420 = vsel %vm416, %v410, 0.0
        %v421 = vadd.f32 %v419, %v420
        %v422 = vsel %vm416, %v411, 0.0
        %v423 = vadd.f32 %v421, %v422
        %v424 = vsel %vm416, %v412, 0.0
        %v425 = vadd.f32 %v423, %v424
        %v426 = vsel %vm416, %v413, 0.0
        %v427 = vadd.f32 %v425, %v426
        %v428 = vsel %vm416, %v414, 0.0
        %v429 = vadd.f32 %v427, %v428
        %v430 = vsel %vm416, %v415, 0.0
        %v431 = vadd.f32 %v429, %v430
        %v432 = vrot.slane %v431, 4
        %v433 = vadd.f32 %v431, %v432
        %v434 = vrot.slane %v433, 2
        %v435 = vadd.f32 %v433, %v434
        %v436 = vrot.slane %v435, 1
        %v437 = vadd.f32 %v435, %v436
        %v438 = vmax.f32 %v437, 0.0
        %v439 = vmul.f32 %v344, %v438
        %v440 = vmul.f32 %v345, %v438
        %v441 = vmul.f32 %v346, %v438
        %v442 = vmul.f32 %v347, %v438
        %v443 = vmul.f32 %v348, %v438
        %v444 = vmul.f32 %v349, %v438
        %v445 = vmul.f32 %v350, %v438
        %v446 = vmul.f32 %v351, %v438
        %v447 = vsel %vm416, %v439, 0.0
        %448 = vadd.xlane.f32.xlu0 %v447
        %v449 = vpop.xlane.xlu0 %448
        %v450 = vsel %vm416, %v440, 0.0
        %451 = vadd.xlane.f32.xlu0 %v450
        %v452 = vpop.xlane.xlu0 %451
        %v453 = vsel %vm416, %v441, 0.0
        %454 = vadd.xlane.f32.xlu0 %v453
        %v455 = vpop.xlane.xlu0 %454
        %v456 = vsel %vm416, %v442, 0.0
        %457 = vadd.xlane.f32.xlu0 %v456
        %v458 = vpop.xlane.xlu0 %457
        %v459 = vsel %vm416, %v443, 0.0
        %460 = vadd.xlane.f32.xlu0 %v459
        %v461 = vpop.xlane.xlu0 %460
        %v462 = vsel %vm416, %v444, 0.0
        %463 = vadd.xlane.f32.xlu0 %v462
        %v464 = vpop.xlane.xlu0 %463
        %v465 = vsel %vm416, %v445, 0.0
        %466 = vadd.xlane.f32.xlu0 %v465
        %v467 = vpop.xlane.xlu0 %466
        %v468 = vsel %vm416, %v446, 0.0
        %469 = vadd.xlane.f32.xlu0 %v468
        %v470 = vpop.xlane.xlu0 %469
        %v471 = vld [vmem:[#allocation3] sm:$0xff]
        %v472 = vld [vmem:[#allocation3 + $0x8] sm:$0xff]
        %v473 = vld [vmem:[#allocation3 + $0x10] sm:$0xff]
        %v474 = vld [vmem:[#allocation3 + $0x18] sm:$0xff]
        %v475 = vld [vmem:[#allocation3 + $0x20] sm:$0xff]
        %v476 = vld [vmem:[#allocation3 + $0x28] sm:$0xff]
        %v477 = vld [vmem:[#allocation3 + $0x30] sm:$0xff]
        %v478 = vld [vmem:[#allocation3 + $0x38] sm:$0xff]
        %480 = vset.pattern.permute.xlu0 0
        %481 = vperm.xlu0 %480, %v471
        %v482 = vpop.permute.xlu0 %481
        %485 = vset.pattern.permute.xlu0 0
        %486 = vperm.xlu0 %485, %v472
        %v487 = vpop.permute.xlu0 %486
        %490 = vset.pattern.permute.xlu0 0
        %491 = vperm.xlu0 %490, %v473
        %v492 = vpop.permute.xlu0 %491
        %495 = vset.pattern.permute.xlu0 0
        %496 = vperm.xlu0 %495, %v474
        %v497 = vpop.permute.xlu0 %496
        %500 = vset.pattern.permute.xlu0 0
        %501 = vperm.xlu0 %500, %v475
        %v502 = vpop.permute.xlu0 %501
        %505 = vset.pattern.permute.xlu0 0
        %506 = vperm.xlu0 %505, %v476
        %v507 = vpop.permute.xlu0 %506
        %510 = vset.pattern.permute.xlu0 0
        %511 = vperm.xlu0 %510, %v477
        %v512 = vpop.permute.xlu0 %511
        %515 = vset.pattern.permute.xlu0 0
        %516 = vperm.xlu0 %515, %v478
        %v517 = vpop.permute.xlu0 %516
        %v519 = vmul.f32 %v336, %v482
        %v520 = vmul.f32 %v337, %v487
        %v521 = vmul.f32 %v338, %v492
        %v522 = vmul.f32 %v339, %v497
        %v523 = vmul.f32 %v340, %v502
        %v524 = vmul.f32 %v341, %v507
        %v525 = vmul.f32 %v342, %v512
        %v526 = vmul.f32 %v343, %v517
        %v527 = vsel %vm416, %v519, 0.0
        %v528 = vsel %vm416, %v520, 0.0
        %v529 = vadd.f32 %v527, %v528
        %v530 = vsel %vm416, %v521, 0.0
        %v531 = vadd.f32 %v529, %v530
        %v532 = vsel %vm416, %v522, 0.0
        %v533 = vadd.f32 %v531, %v532
        %v534 = vsel %vm416, %v523, 0.0
        %v535 = vadd.f32 %v533, %v534
        %v536 = vsel %vm416, %v524, 0.0
        %v537 = vadd.f32 %v535, %v536
        %v538 = vsel %vm416, %v525, 0.0
        %v539 = vadd.f32 %v537, %v538
        %v540 = vsel %vm416, %v526, 0.0
        %v541 = vadd.f32 %v539, %v540
        %v542 = vrot.slane %v541, 4
        %v543 = vadd.f32 %v541, %v542
        %v544 = vrot.slane %v543, 2
        %v545 = vadd.f32 %v543, %v544
        %v546 = vrot.slane %v545, 1
        %v547 = vadd.f32 %v545, %v546
        %v548 = vmax.f32 %v547, 0.0
        %v549 = vmul.f32 %v344, %v548
        %v550 = vmul.f32 %v345, %v548
        %v551 = vmul.f32 %v346, %v548
        %v552 = vmul.f32 %v347, %v548
        %v553 = vmul.f32 %v348, %v548
        %v554 = vmul.f32 %v349, %v548
        %v555 = vmul.f32 %v350, %v548
        %v556 = vmul.f32 %v351, %v548
        %v557 = vsel %vm416, %v549, 0.0
        %558 = vadd.xlane.f32.xlu0 %v557
        %v559 = vpop.xlane.xlu0 %558
        %v560 = vsel %vm416, %v550, 0.0
        %561 = vadd.xlane.f32.xlu0 %v560
        %v562 = vpop.xlane.xlu0 %561
        %v563 = vsel %vm416, %v551, 0.0
        %564 = vadd.xlane.f32.xlu0 %v563
        %v565 = vpop.xlane.xlu0 %564
        %v566 = vsel %vm416, %v552, 0.0
        %567 = vadd.xlane.f32.xlu0 %v566
        %v568 = vpop.xlane.xlu0 %567
        %v569 = vsel %vm416, %v553, 0.0
        %570 = vadd.xlane.f32.xlu0 %v569
        %v571 = vpop.xlane.xlu0 %570
        %v572 = vsel %vm416, %v554, 0.0
        %573 = vadd.xlane.f32.xlu0 %v572
        %v574 = vpop.xlane.xlu0 %573
        %v575 = vsel %vm416, %v555, 0.0
        %576 = vadd.xlane.f32.xlu0 %v575
        %v577 = vpop.xlane.xlu0 %576
        %v578 = vsel %vm416, %v556, 0.0
        %579 = vadd.xlane.f32.xlu0 %v578
        %v580 = vpop.xlane.xlu0 %579
        %v581 = vadd.f32 %v449, %v559
        %v582 = vadd.f32 %v452, %v562
        %v583 = vadd.f32 %v455, %v565
        %v584 = vadd.f32 %v458, %v568
        %v585 = vadd.f32 %v461, %v571
        %v586 = vadd.f32 %v464, %v574
        %v587 = vadd.f32 %v467, %v577
        %v588 = vadd.f32 %v470, %v580
        %v589 = vxor.u32 %v581, 2147483648
        %v590 = vxor.u32 %v582, 2147483648
        %v591 = vxor.u32 %v583, 2147483648
        %v592 = vxor.u32 %v584, 2147483648
        %v593 = vxor.u32 %v585, 2147483648
        %v594 = vxor.u32 %v586, 2147483648
        %v595 = vxor.u32 %v587, 2147483648
        %v596 = vxor.u32 %v588, 2147483648
        %v597 = vmul.f32 %v589, 1.442695
        %v598 = vpow.pop %v597
        %v599 = vmul.f32 %v590, 1.442695
        %v600 = vpow.pop %v599
        %v601 = vmul.f32 %v591, 1.442695
        %v602 = vpow.pop %v601
        %v603 = vmul.f32 %v592, 1.442695
        %v604 = vpow.pop %v603
        %v605 = vmul.f32 %v593, 1.442695
        %v606 = vpow.pop %v605
        %v607 = vmul.f32 %v594, 1.442695
        %v608 = vpow.pop %v607
        %v609 = vmul.f32 %v595, 1.442695
        %v610 = vpow.pop %v609
        %v611 = vmul.f32 %v596, 1.442695
        %v612 = vpow.pop %v611
        %v613 = vadd.f32 %v598, 1.0
        %v614 = vadd.f32 %v600, 1.0
        %v615 = vadd.f32 %v602, 1.0
        %v616 = vadd.f32 %v604, 1.0
        %v617 = vadd.f32 %v606, 1.0
        %v618 = vadd.f32 %v608, 1.0
        %v619 = vadd.f32 %v610, 1.0
        %v620 = vadd.f32 %v612, 1.0
        %v621 = vrcp.pop %v613
        %v622 = vmul.f32 1.0, %v621
        %v623 = vrcp.pop %v614
        %v624 = vmul.f32 1.0, %v623
        %v625 = vrcp.pop %v615
        %v626 = vmul.f32 1.0, %v625
        %v627 = vrcp.pop %v616
        %v628 = vmul.f32 1.0, %v627
        %v629 = vrcp.pop %v617
        %v630 = vmul.f32 1.0, %v629
        %v631 = vrcp.pop %v618
        %v632 = vmul.f32 1.0, %v631
        %v633 = vrcp.pop %v619
        %v634 = vmul.f32 1.0, %v633
        %v635 = vrcp.pop %v620
        %v636 = vmul.f32 1.0, %v635
        %637 = vst.msk [vmem:[%s198] sm:$0xff] %vm276, %v622
        %638 = vst.msk [vmem:[%s198 + $0x8] sm:$0xff] %vm276, %v624
        %639 = vst.msk [vmem:[%s198 + $0x10] sm:$0xff] %vm276, %v626
        %640 = vst.msk [vmem:[%s198 + $0x18] sm:$0xff] %vm276, %v628
        %641 = vst.msk [vmem:[%s198 + $0x20] sm:$0xff] %vm276, %v630
        %642 = vst.msk [vmem:[%s198 + $0x28] sm:$0xff] %vm276, %v632
        %643 = vst.msk [vmem:[%s198 + $0x30] sm:$0xff] %vm276, %v634
        %644 = vst.msk [vmem:[%s198 + $0x38] sm:$0xff] %vm276, %v636
      $region40: #{channel_attention_forward.1} parent=31 // pred_fallthru
        _
      %p645 = scmp.lt.s32.totalorder %s18, 1
      %s646 = scalar_select %p645, %s18, 1
      %s647 = smul.addr %s646, 8
      %s648 = smul.addr %s647, 8
      %s649 = scalar_lea.vmem %s3, %s648
      // Predicated region
      $region41: #{channel_attention_forward.1} parent=31 // pred_check
        %p650 = pneg %p114
      $region42: #{channel_attention_forward.1} parent=31 // pred_check_branch
        %652 = sbr.rel (%p650) target = $region44
      $region43: #{channel_attention_forward.1} parent=31 // pred_region
        _
      $region44: #{channel_attention_forward.1} parent=31 // pred_fallthru
        _
    $region32: #{channel_attention_forward.1} parent=5 // pred_fallthru
      _
    %p653 = scmp.le.s32.totalorder 2, %s9
    // Predicated region
    $region45: #{channel_attention_forward.1} parent=5 // pred_check
      %p654 = pneg %p653
    $region46: #{channel_attention_forward.1} parent=5 // pred_check_branch
      %656 = sbr.rel (%p654) target = $region48
    $region47: #{channel_attention_forward.1} parent=5 // pred_region
      %s657 = ssub.s32 %s9, 2
      // Predicated region
      $region49: #{channel_attention_forward.1} parent=47 // pred_check
        %p658 = pneg %p120
      $region50: #{channel_attention_forward.1} parent=47 // pred_check_branch
        %660 = sbr.rel (%p658) target = $region52
      $region51: #{channel_attention_forward.1} parent=47 // pred_region
        %p661 = scmp.lt.s32.totalorder %s20, 1
        %s662 = scalar_select %p661, %s20, 1
        %s663 = smul.addr %s662, 8
        %s664 = smul.addr %s663, 8
        %s665 = scalar_lea.vmem %s3, %s664
      $region52: #{channel_attention_forward.1} parent=47 // pred_fallthru
        _
    $region48: #{channel_attention_forward.1} parent=5 // pred_fallthru
      _
  $region6: #{channel_attention_forward.1} parent=0 // loop_footer
    %s13 = sadd.s32 1, %s9
  $region7: #{channel_attention_forward.1} parent=0 // loop_footer_branch
    %8 = sbr.rel target = $region3
  $region8: #{channel_attention_forward.1} parent=0 // loop_exit
    _

</llo_original>
